<compile_context>
chip_gen: v7x
topology: tpu7x:2x2x1
jax: 0.10.0
libtpu: 0.0.40
codegen_flags: <defaults>
</compile_context>

<pallas_src>
import functools

import jax
import jax.numpy as jnp
from jax import lax
from jax.experimental import pallas as pl
from jax.experimental.pallas import tpu as pltpu


def _assembler_kernel(b_tile, t_tile, n_d, c_dr, sum_dc, d_total,
                      dyn_cards, dyn_offsets,
                      static_ref,   # (b_tile, 1, d_total) f32 : [static-cat emb | static real | zeros]
                      dc_ref,       # (b_tile, t_tile, n_d) i32 : raw dyn-cat indices
                      dr_ref,       # (b_tile, t_tile, c_dr)    : dynamic real
                      wdyn_ref,     # (sum_dc, d_total) f32 : block-diag dyn tables at their out cols
                      wdr_ref,      # (c_dr, d_total) f32   : identity at the trailing c_dr out cols
                      out_ref):     # (b_tile, t_tile, d_total) f32
    rows = b_tile * t_tile

    # --- multi-hot over the concatenated dyn-cat vocabulary (offsets are static) ---
    dc = dc_ref[...].reshape(rows, n_d)
    iota = lax.broadcasted_iota(jnp.int32, (1, sum_dc), 1)
    hot = None
    for j in range(n_d):                                   # n_d is small: static unroll
        # clamp matches jnp-gather semantics for out-of-range indices
        idx = jnp.clip(dc[:, j:j + 1], 0, dyn_cards[j] - 1) + dyn_offsets[j]
        eq = idx == iota
        hot = eq if hot is None else jnp.logical_or(hot, eq)
    mh = hot.astype(jnp.float32)                           # (rows, sum_dc), single cast

    # --- fused assembly: dyn embeddings + dyn-real passthrough land directly in
    #     their output columns via the two (free) MXU matmuls ---
    acc = jnp.dot(mh, wdyn_ref[...], preferred_element_type=jnp.float32)
    dr = dr_ref[...].reshape(rows, c_dr).astype(jnp.float32)
    acc = acc + jnp.dot(dr, wdr_ref[...], preferred_element_type=jnp.float32)

    # --- add the per-b static slab (broadcast over T) and store once, full width ---
    out_ref[...] = acc.reshape(b_tile, t_tile, d_total) + static_ref[...]


def _choose_tiles(B, T, n_d, c_dr, sum_dc, d_total, vmem_budget):
    """Pick (b_tile, t_tile) so the per-step footprint fits in `vmem_budget`."""
    # bytes per output row in flight: double-buffered in/out blocks + multihot + acc
    per_row = 4 * (2 * (n_d + c_dr)      # dc + dr input blocks (x2 buffers)
                   + 3 * d_total         # out block (x2) + matmul accumulator
                   + 2 * sum_dc)         # multi-hot bool + f32
    resident = 8 * (sum_dc + c_dr) * d_total   # grid-invariant tables (x2 buffers)
    rows_cap = max(8, (vmem_budget - resident) // max(per_row, 1))
    rows_cap = int(min(rows_cap, 4096))

    if T >= rows_cap or T % 8 != 0:
        # tile along T only (block second-minor dim must be a multiple of 8 or == T)
        b_tile = 1
        t_tile = T if T <= rows_cap else max(8, (rows_cap // 8) * 8)
    else:
        # T is small & sublane-aligned: pack several batch elements per grid step
        t_tile = T
        b_tile = max(1, min(B, rows_cap // T))
    return b_tile, t_tile


def feature_assembler(feat_static_cat, feat_static_real,
                      feat_dynamic_cat, feat_dynamic_real,
                      static_tables, dyn_tables, T):
    B = feat_static_cat.shape[0]
    c_sr = feat_static_real.shape[-1]
    n_d = feat_dynamic_cat.shape[-1]
    c_dr = feat_dynamic_real.shape[-1]

    static_dims = [int(t.shape[1]) for t in static_tables]
    dyn_cards = tuple(int(t.shape[0]) for t in dyn_tables)
    dyn_dims = [int(t.shape[1]) for t in dyn_tables]

    c_static = sum(static_dims) + c_sr
    sum_dc = sum(dyn_cards)
    sum_dd = sum(dyn_dims)
    d_total = c_static + sum_dd + c_dr

    dyn_offsets = []
    acc = 0
    for c in dyn_cards:
        dyn_offsets.append(acc)
        acc += c
    dyn_offsets = tuple(dyn_offsets)

    # --- hoisted per-b static slab, zero-padded to the full output width ---
    s_parts = [tab[feat_static_cat[:, j]].astype(jnp.float32)
               for j, tab in enumerate(static_tables)]
    s_parts.append(feat_static_real.astype(jnp.float32))
    s_parts.append(jnp.zeros((B, sum_dd + c_dr), jnp.float32))
    static_pad = jnp.concatenate(s_parts, axis=-1)[:, None, :]        # (B, 1, d_total)

    # --- shared weights: multihot -> [0 | dyn embeds | 0], dyn_real -> [0 | 0 | dyn_real] ---
    w_dyn = jnp.zeros((sum_dc, d_total), jnp.float32)
    ro, co = 0, c_static
    for tab, c, d in zip(dyn_tables, dyn_cards, dyn_dims):
        w_dyn = w_dyn.at[ro:ro + c, co:co + d].set(tab.astype(jnp.float32))
        ro += c
        co += d
    w_dr = jnp.zeros((c_dr, d_total), jnp.float32)
    w_dr = w_dr.at[:, c_static + sum_dd:].set(jnp.eye(c_dr, dtype=jnp.float32))

    if feat_dynamic_cat.dtype != jnp.int32:
        feat_dynamic_cat = feat_dynamic_cat.astype(jnp.int32)

    # --- per-chip VMEM budget -> tile sizes + scoped-VMEM limit ---
    try:
        vmem_cap = int(pltpu.get_tpu_info().vmem_capacity_bytes)
    except Exception:
        vmem_cap = 64 * 1024 * 1024          # conservative (v7x-sized) fallback
    vmem_limit = int(min(vmem_cap * 3 // 4, 96 * 1024 * 1024))
    b_tile, t_tile = _choose_tiles(B, T, n_d, c_dr, sum_dc, d_total, vmem_limit // 2)

    grid = (pl.cdiv(B, b_tile), pl.cdiv(T, t_tile))

    kernel = functools.partial(_assembler_kernel, b_tile, t_tile, n_d, c_dr,
                               sum_dc, d_total, dyn_cards, dyn_offsets)

    out = pl.pallas_call(
        kernel,
        grid=grid,
        in_specs=[
            # per-b static slab (broadcast over T tiles)
            pl.BlockSpec((b_tile, 1, d_total), lambda bi, ti: (bi, 0, 0)),
            # raw dyn-cat indices / dyn real, per (b-tile, T-tile)
            pl.BlockSpec((b_tile, t_tile, n_d), lambda bi, ti: (bi, ti, 0)),
            pl.BlockSpec((b_tile, t_tile, c_dr), lambda bi, ti: (bi, ti, 0)),
            # grid-invariant tables, fully resident
            # TODO(synk): when sum_dc*d_total*4 is large (v7x 64MiB VMEM), give these
            # pipeline_mode=pl.Buffered(1) to drop the redundant second buffer.
            pl.BlockSpec((sum_dc, d_total), lambda bi, ti: (0, 0)),
            pl.BlockSpec((c_dr, d_total), lambda bi, ti: (0, 0)),
        ],
        out_specs=pl.BlockSpec((b_tile, t_tile, d_total), lambda bi, ti: (bi, ti, 0)),
        out_shape=jax.ShapeDtypeStruct((B, T, d_total), jnp.float32),
        compiler_params=pltpu.CompilerParams(
            dimension_semantics=("parallel", "parallel"),
            vmem_limit_bytes=vmem_limit,
        ),
    )(static_pad, feat_dynamic_cat, feat_dynamic_real, w_dyn, w_dr)
    return out


def _reference(feat_static_cat, feat_static_real, feat_dynamic_cat, feat_dynamic_real,
               static_tables, dyn_tables, T):
    B = feat_static_cat.shape[0]
    s_emb = jnp.concatenate(
        [tab[feat_static_cat[:, j]] for j, tab in enumerate(static_tables)], axis=-1)
    s_emb = jnp.broadcast_to(s_emb[:, None, :], (B, T, s_emb.shape[-1]))
    s_real = jnp.broadcast_to(feat_static_real[:, None, :],
                              (B, T, feat_static_real.shape[-1]))
    d_emb = jnp.concatenate(
        [tab[feat_dynamic_cat[:, :, j]] for j, tab in enumerate(dyn_tables)], axis=-1)
    return jnp.concatenate(
        [s_emb, s_real, d_emb, feat_dynamic_real], axis=-1).astype(jnp.float32)


if __name__ == "__main__":
    B, T = 2, 8
    static_cards, static_dims = [5, 7], [3, 4]
    dyn_cards, dyn_dims = [4, 6], [2, 5]
    c_sr, c_dr = 3, 4

    key = jax.random.PRNGKey(0)
    keys = jax.random.split(key, 8)

    # Deterministic "nn.Embedding"-style weights (N(0,1)).
    static_tables = [jax.random.normal(keys[i], (c, d), jnp.float32)
                     for i, (c, d) in enumerate(zip(static_cards, static_dims))]
    dyn_tables = [jax.random.normal(keys[2 + i], (c, d), jnp.float32)
                  for i, (c, d) in enumerate(zip(dyn_cards, dyn_dims))]

    feat_static_cat = jnp.stack(
        [jax.random.randint(jax.random.fold_in(keys[4], j), (B,), 0, c)
         for j, c in enumerate(static_cards)], axis=-1).astype(jnp.int32)       # (B, 2)
    feat_static_real = jax.random.normal(keys[5], (B, c_sr), jnp.float32)        # (B, 3)
    feat_dynamic_cat = jnp.stack(
        [jax.random.randint(jax.random.fold_in(keys[6], j), (B, T), 0, c)
         for j, c in enumerate(dyn_cards)], axis=-1).astype(jnp.int32)           # (B, T, 2)
    feat_dynamic_real = jax.random.normal(keys[7], (B, T, c_dr), jnp.float32)    # (B, T, 4)

    out = feature_assembler(feat_static_cat, feat_static_real,
                            feat_dynamic_cat, feat_dynamic_real,
                            static_tables, dyn_tables, T)
    out = jax.block_until_ready(out)

    ref = _reference(feat_static_cat, feat_static_real,
                     feat_dynamic_cat, feat_dynamic_real,
                     static_tables, dyn_tables, T)

    d_total = sum(static_dims) + c_sr + sum(dyn_dims) + c_dr
    assert out.shape == (B, T, d_total)
    assert out.dtype == jnp.float32
    assert jnp.allclose(out, ref, atol=1e-4, rtol=1e-4)
    print("KERNEL_OK")
</pallas_src>

<mosaic_0001>
module attributes {stable_mosaic.version = 11 : i64} {
  func.func @_assembler_kernel(%arg0: i32, %arg1: i32, %arg2: memref<2x1x21xf32, #tpu.memory_space<vmem>>, %arg3: memref<2x8x2xi32, #tpu.memory_space<vmem>>, %arg4: memref<2x8x4xf32, #tpu.memory_space<vmem>>, %arg5: memref<10x21xf32, #tpu.memory_space<vmem>>, %arg6: memref<4x21xf32, #tpu.memory_space<vmem>>, %arg7: memref<2x8x21xf32, #tpu.memory_space<vmem>>) attributes {dimension_semantics = [#tpu.dimension_semantics<parallel>, #tpu.dimension_semantics<parallel>], iteration_bounds = array<i64: 1, 1>, scalar_prefetch = 0 : i64, scratch_operands = 0 : i64, tpu.core_type = #tpu.core_type<tc>, window_params = [{transform_indices = @transform_0, window_bounds = array<i64: 2, 1, 21>}, {transform_indices = @transform_1, window_bounds = array<i64: 2, 8, 2>}, {transform_indices = @transform_2, window_bounds = array<i64: 2, 8, 4>}, {pipeline_mode = #tpu.pipeline_mode<synchronous>, transform_indices = @transform_3, window_bounds = array<i64: 10, 21>}, {pipeline_mode = #tpu.pipeline_mode<synchronous>, transform_indices = @transform_4, window_bounds = array<i64: 4, 21>}, {transform_indices = @transform_5, window_bounds = array<i64: 2, 8, 21>}]} {
    %c0 = arith.constant 0 : index
    %c0_0 = arith.constant 0 : index
    %c0_1 = arith.constant 0 : index
    %0 = vector.load %arg3[%c0, %c0_0, %c0_1] : memref<2x8x2xi32, #tpu.memory_space<vmem>>, vector<2x8x2xi32>
    %1 = vector.shape_cast %0 : vector<2x8x2xi32> to vector<16x2xi32>
    %2 = tpu.iota {dimensions = array<i32: 1>} : vector<1x10xi32>
    %3 = vector.extract_strided_slice %1 {offsets = [0, 0], sizes = [16, 1], strides = [1, 1]} : vector<16x2xi32> to vector<16x1xi32>
    %c0_i32 = arith.constant 0 : i32
    %c3_i32 = arith.constant 3 : i32
    %4 = vector.broadcast %c0_i32 : i32 to vector<16x1xi32>
    %5 = arith.maxsi %4, %3 : vector<16x1xi32>
    %6 = vector.broadcast %c3_i32 : i32 to vector<16x1xi32>
    %7 = arith.minsi %6, %5 : vector<16x1xi32>
    %c0_i32_2 = arith.constant 0 : i32
    %8 = vector.broadcast %c0_i32_2 : i32 to vector<16x1xi32>
    %9 = arith.addi %7, %8 : vector<16x1xi32>
    %10 = vector.broadcast %9 : vector<16x1xi32> to vector<16x10xi32>
    %11 = vector.broadcast %2 : vector<1x10xi32> to vector<16x10xi32>
    %12 = arith.cmpi eq, %10, %11 : vector<16x10xi32>
    %13 = vector.extract_strided_slice %1 {offsets = [0, 1], sizes = [16, 1], strides = [1, 1]} : vector<16x2xi32> to vector<16x1xi32>
    %c0_i32_3 = arith.constant 0 : i32
    %c5_i32 = arith.constant 5 : i32
    %14 = vector.broadcast %c0_i32_3 : i32 to vector<16x1xi32>
    %15 = arith.maxsi %14, %13 : vector<16x1xi32>
    %16 = vector.broadcast %c5_i32 : i32 to vector<16x1xi32>
    %17 = arith.minsi %16, %15 : vector<16x1xi32>
    %c4_i32 = arith.constant 4 : i32
    %18 = vector.broadcast %c4_i32 : i32 to vector<16x1xi32>
    %19 = arith.addi %17, %18 : vector<16x1xi32>
    %20 = vector.broadcast %19 : vector<16x1xi32> to vector<16x10xi32>
    %21 = vector.broadcast %2 : vector<1x10xi32> to vector<16x10xi32>
    %22 = arith.cmpi eq, %20, %21 : vector<16x10xi32>
    %23 = arith.ori %12, %22 : vector<16x10xi1>
    %24 = arith.extui %23 : vector<16x10xi1> to vector<16x10xi32>
    %25 = arith.sitofp %24 : vector<16x10xi32> to vector<16x10xf32>
    %c0_4 = arith.constant 0 : index
    %c0_5 = arith.constant 0 : index
    %26 = vector.load %arg5[%c0_4, %c0_5] : memref<10x21xf32, #tpu.memory_space<vmem>>, vector<10x21xf32>
    %cst = arith.constant dense<0.000000e+00> : vector<16x21xf32>
    %27 = tpu.matmul %25, %26, %cst {dimension_numbers = #tpu.dot_dimension_numbers<[1], [0], [0], [1], [0, 0, 1, 1], [], []>} : vector<16x10xf32>, vector<10x21xf32>, vector<16x21xf32> -> vector<16x21xf32>
    %c0_6 = arith.constant 0 : index
    %c0_7 = arith.constant 0 : index
    %c0_8 = arith.constant 0 : index
    %28 = vector.load %arg4[%c0_6, %c0_7, %c0_8] : memref<2x8x4xf32, #tpu.memory_space<vmem>>, vector<2x8x4xf32>
    %29 = vector.shape_cast %28 : vector<2x8x4xf32> to vector<16x4xf32>
    %c0_9 = arith.constant 0 : index
    %c0_10 = arith.constant 0 : index
    %30 = vector.load %arg6[%c0_9, %c0_10] : memref<4x21xf32, #tpu.memory_space<vmem>>, vector<4x21xf32>
    %cst_11 = arith.constant dense<0.000000e+00> : vector<16x21xf32>
    %31 = tpu.matmul %29, %30, %cst_11 {dimension_numbers = #tpu.dot_dimension_numbers<[1], [0], [0], [1], [0, 0, 1, 1], [], []>} : vector<16x4xf32>, vector<4x21xf32>, vector<16x21xf32> -> vector<16x21xf32>
    %32 = arith.addf %27, %31 : vector<16x21xf32>
    %33 = vector.shape_cast %32 : vector<16x21xf32> to vector<2x8x21xf32>
    %c0_12 = arith.constant 0 : index
    %c0_13 = arith.constant 0 : index
    %c0_14 = arith.constant 0 : index
    %34 = vector.load %arg2[%c0_12, %c0_13, %c0_14] : memref<2x1x21xf32, #tpu.memory_space<vmem>>, vector<2x1x21xf32>
    %35 = vector.broadcast %34 : vector<2x1x21xf32> to vector<2x8x21xf32>
    %36 = arith.addf %33, %35 : vector<2x8x21xf32>
    %c0_15 = arith.constant 0 : index
    %c0_16 = arith.constant 0 : index
    %c0_17 = arith.constant 0 : index
    %37 = vector.load %arg7[%c0_15, %c0_16, %c0_17] : memref<2x8x21xf32, #tpu.memory_space<vmem>>, vector<2x8x21xf32>
    tpu.vector_store %arg7[%c0_15, %c0_16, %c0_17], %36 {strides = array<i32>} : memref<2x8x21xf32, #tpu.memory_space<vmem>>, vector<2x8x21xf32>,
    return
  }
  func.func @transform_0(%arg0: i32, %arg1: i32) -> (i32, i32, i32) {
    %c0_i32 = arith.constant 0 : i32
    %c0_i32_0 = arith.constant 0 : i32
    %c0_i32_1 = arith.constant 0 : i32
    return %arg0, %c0_i32, %c0_i32_0 : i32, i32, i32
  }
  func.func @transform_1(%arg0: i32, %arg1: i32) -> (i32, i32, i32) {
    %c0_i32 = arith.constant 0 : i32
    %c0_i32_0 = arith.constant 0 : i32
    return %arg0, %arg1, %c0_i32 : i32, i32, i32
  }
  func.func @transform_2(%arg0: i32, %arg1: i32) -> (i32, i32, i32) {
    %c0_i32 = arith.constant 0 : i32
    %c0_i32_0 = arith.constant 0 : i32
    return %arg0, %arg1, %c0_i32 : i32, i32, i32
  }
  func.func @transform_3(%arg0: i32, %arg1: i32) -> (i32, i32) {
    %c0_i32 = arith.constant 0 : i32
    %c0_i32_0 = arith.constant 0 : i32
    %c0_i32_1 = arith.constant 0 : i32
    return %c0_i32, %c0_i32_0 : i32, i32
  }
  func.func @transform_4(%arg0: i32, %arg1: i32) -> (i32, i32) {
    %c0_i32 = arith.constant 0 : i32
    %c0_i32_0 = arith.constant 0 : i32
    %c0_i32_1 = arith.constant 0 : i32
    return %c0_i32, %c0_i32_0 : i32, i32
  }
  func.func @transform_5(%arg0: i32, %arg1: i32) -> (i32, i32, i32) {
    %c0_i32 = arith.constant 0 : i32
    %c0_i32_0 = arith.constant 0 : i32
    return %arg0, %arg1, %c0_i32 : i32, i32, i32
  }
}

</mosaic_0001>

<llo_original>
// kernel: tpu_custom_call.1
$region0: #{tpu_custom_call.1}
  #allocation0 [shape = 'u32[]', space=smem, size = 0x4, offset = 0x4, fixed_abs, tag = 'smem constant byte address 0x4 - core index']
  #allocation1 [shape = 'u32[144,128]{1,0:T(1,128)}', space=vmem, size = 0x12000, scoped, tag = 'internal scratch']
  %s0 = inlined_call_operand.vmem [shape: f32[2,1,21], index: 0, kind: input, shape index: {}]
  %s1 = inlined_call_operand.vmem [shape: s32[2,8,2], index: 1, kind: input, shape index: {}]
  %s2 = inlined_call_operand.vmem [shape: f32[2,8,4], index: 2, kind: input, shape index: {}]
  %s3 = inlined_call_operand.vmem [shape: f32[10,21], index: 3, kind: input, shape index: {}]
  %s4 = inlined_call_operand.vmem [shape: f32[4,21], index: 4, kind: input, shape index: {}]
  %s5 = inlined_call_operand.hbm [shape: f32[2,8,21], index: 5, kind: output, shape index: {}]
  %s6 = sld [smem:[#allocation0]]
  $region30: #{tpu_custom_call.1} parent=0
    _
  %s8 = ssub.s32 1, %s6
  %s9 = scalar_select 0, %s8, %s6
  $region1: #{tpu_custom_call.1} parent=0
    #allocation2 [shape = 'u8[8192]{0}', space=vmem, size = 0x2000, scoped, tag = 'output window, operand 0, single buffered']
    #allocation3 [shape = 's32[1]{0}', space=sflag, size = 0x4, scoped, tag = 'scoped memory for tpu_custom_call.1']
    %10 = vsyncpa [#allocation3], 0
    // Predicated region
    $region2: #{tpu_custom_call.1} parent=1 // pred_check
      _
    $region3: #{tpu_custom_call.1} parent=1 // pred_check_branch
      %12 = sbr.rel (0) target = $region5
    $region4: #{tpu_custom_call.1} parent=1 // pred_region
      _
    $region5: #{tpu_custom_call.1} parent=1 // pred_fallthru
      _
    // Predicated region
    $region6: #{tpu_custom_call.1} parent=1 // pred_check
      _
    $region7: #{tpu_custom_call.1} parent=1 // pred_check_branch
      %14 = sbr.rel (0) target = $region9
    $region8: #{tpu_custom_call.1} parent=1 // pred_region
      _
    $region9: #{tpu_custom_call.1} parent=1 // pred_fallthru
      _
    // Predicated region
    $region10: #{tpu_custom_call.1} parent=1 // pred_check
      _
    $region11: #{tpu_custom_call.1} parent=1 // pred_check_branch
      %16 = sbr.rel (0) target = $region13
    $region12: #{tpu_custom_call.1} parent=1 // pred_region
      _
    $region13: #{tpu_custom_call.1} parent=1 // pred_fallthru
      _
    // Predicated region
    $region14: #{tpu_custom_call.1} parent=1 // pred_check
      _
    $region15: #{tpu_custom_call.1} parent=1 // pred_check_branch
      %18 = sbr.rel (0) target = $region17
    $region16: #{tpu_custom_call.1} parent=1 // pred_region
      _
    $region17: #{tpu_custom_call.1} parent=1 // pred_fallthru
      _
    // Predicated region
    $region18: #{tpu_custom_call.1} parent=1 // pred_check
      _
    $region19: #{tpu_custom_call.1} parent=1 // pred_check_branch
      %20 = sbr.rel (0) target = $region21
    $region20: #{tpu_custom_call.1} parent=1 // pred_region
      _
    $region21: #{tpu_custom_call.1} parent=1 // pred_fallthru
      _
    %v21 = vld [vmem:[%s1] sm:$0xff]
    %v22 = vld [vmem:[%s1 + $0x8] sm:$0xff]
    %v23 = vlaneseq
    %v24 = vand.u32 %v23, 127
    %vm25 = vcmp.gt.s32.totalorder %v21, 0
    %v26 = vsel %vm25, %v21, 0
    %vm27 = vcmp.gt.s32.totalorder %v22, 0
    %v28 = vsel %vm27, %v22, 0
    %vm29 = vcmp.lt.s32.totalorder %v26, 3
    %v30 = vsel %vm29, %v26, 3
    %vm31 = vcmp.lt.s32.totalorder %v28, 3
    %v32 = vsel %vm31, %v28, 3
    %33 = vset.pattern.permute.xlu0 0
    %34 = vperm.xlu0 %33, %v30
    %v35 = vpop.permute.xlu0 %34
    %36 = vset.pattern.permute.xlu0 0
    %37 = vperm.xlu0 %36, %v32
    %v38 = vpop.permute.xlu0 %37
    %vm39 = vcmp.eq.s32.totalorder %v35, %v24
    %vm40 = vcmp.eq.s32.totalorder %v38, %v24
    %vm41 = vcmp.lt.s32.totalorder %v26, 5
    %v42 = vsel %vm41, %v26, 5
    %vm43 = vcmp.lt.s32.totalorder %v28, 5
    %v44 = vsel %vm43, %v28, 5
    %v45 = vadd.s32 %v42, 4
    %v46 = vadd.s32 %v44, 4
    %47 = vset.pattern.permute.xlu0 1
    %48 = vperm.xlu0 %47, %v45
    %v49 = vpop.permute.xlu0 %48
    %50 = vset.pattern.permute.xlu0 1
    %51 = vperm.xlu0 %50, %v46
    %v52 = vpop.permute.xlu0 %51
    %vm53 = vcmp.eq.s32.totalorder %v49, %v24
    %vm54 = vcmp.eq.s32.totalorder %v52, %v24
    %vm55 = vmor %vm39, %vm53
    %vm56 = vmor %vm40, %vm54
    %v57 = vsel %vm55, 1, 0
    %v58 = vsel %vm56, 1, 0
    %v59 = vcvt.s32.f32 %v57
    %v60 = vcvt.s32.f32 %v58
    %v61 = vld [vmem:[%s3] sm:$0xff]
    %v62 = vld [vmem:[%s3 + $0x8] sm:$0x3]
    %v63 = vld [vmem:[%s2] sm:$0xff]
    %v64 = vld [vmem:[%s2 + $0x8] sm:$0xff]
    %v65 = vld [vmem:[%s4] sm:$0xf]
    %vm66 = vcmask 31744
    %v68 = vsel %vm66, %v63, 0
    %v71 = vsel %vm66, %v64, 0
    %vm73 = vcmask 1043456
    %v75 = vsel %vm73, %v65, 0
    %77 = vmatprep.subr.mxu0 0.0
    %78 = vmatpush1.msra.mxu0 %v75
    %79 = vmatprep.subr.mxu0 0.0
    %80 = vmatpush1.msra.mxu0 0.0
    %81 = vmatprep.subr.mxu0 0.0
    %82 = vmatpush1.msra.mxu0 0.0
    %83 = vmatprep.subr.mxu0 0.0
    %84 = vmatpush1.msra.mxu0 0.0
    %85 = vmatprep.subr.mxu0 0.0
    %86 = vmatpush1.msra.mxu0 0.0
    %87 = vmatprep.subr.mxu0 0.0
    %88 = vmatpush1.msra.mxu0 0.0
    %89 = vmatprep.subr.mxu0 0.0
    %90 = vmatpush1.msra.mxu0 0.0
    %91 = vmatprep.subr.mxu0 0.0
    %92 = vmatpush1.msra.mxu0 0.0
    %93 = vmatprep.subr.mxu0 0.0
    %94 = vmatpush1.msra.mxu0 0.0
    %95 = vmatprep.subr.mxu0 0.0
    %96 = vmatpush1.msra.mxu0 0.0
    %97 = vmatprep.subr.mxu0 0.0
    %98 = vmatpush1.msra.mxu0 0.0
    %99 = vmatprep.subr.mxu0 0.0
    %100 = vmatpush1.msra.mxu0 0.0
    %101 = vmatprep.subr.mxu0 0.0
    %102 = vmatpush1.msra.mxu0 0.0
    %103 = vmatprep.subr.mxu0 0.0
    %104 = vmatpush1.msra.mxu0 0.0
    %105 = vmatprep.subr.mxu0 0.0
    %106 = vmatpush1.msra.mxu0 0.0
    %107 = vmatprep.subr.mxu0 0.0
    %108 = vmatpush1.msra.mxu0 0.0
    %109 = vmatprep.subr.mxu0 0.0
    %110 = vmatpush1.msra.mxu0 0.0
    %111 = vmatprep.subr.mxu0 0.0
    %112 = vmatpush1.msra.mxu0 0.0
    %113 = vmatprep.subr.mxu0 0.0
    %114 = vmatpush1.msra.mxu0 0.0
    %115 = vmatprep.subr.mxu0 0.0
    %116 = vmatpush1.msra.mxu0 0.0
    %117 = vmatprep.subr.mxu0 0.0
    %118 = vmatpush1.msra.mxu0 0.0
    %119 = vmatprep.subr.mxu0 0.0
    %120 = vmatpush1.msra.mxu0 0.0
    %121 = vmatprep.subr.mxu0 0.0
    %122 = vmatpush1.msra.mxu0 0.0
    %123 = vmatprep.subr.mxu0 0.0
    %124 = vmatpush1.msra.mxu0 0.0
    %125 = vmatprep.subr.mxu0 0.0
    %126 = vmatpush1.msra.mxu0 0.0
    %127 = vmatprep.subr.mxu0 0.0
    %128 = vmatpush1.msra.mxu0 0.0
    %129 = vmatprep.subr.mxu0 0.0
    %130 = vmatpush1.msra.mxu0 0.0
    %131 = vmatprep.subr.mxu0 0.0
    %132 = vmatpush1.msra.mxu0 0.0
    %133 = vmatprep.subr.mxu0 0.0
    %134 = vmatpush1.msra.mxu0 0.0
    %135 = vmatprep.subr.mxu0 0.0
    %136 = vmatpush1.msra.mxu0 0.0
    %137 = vmatprep.subr.mxu0 0.0
    %138 = vmatpush1.msra.mxu0 0.0
    %139 = vmatprep.subr.mxu0 0.0
    %140 = vmatpush1.msra.mxu0 0.0
    %141 = vmatprep.mubr.f32.mxu0 0.0
    %142 = vmatmul.mubr.f32.gmra.mrb[0].mxu0 %v68
    %v143 = vpop.f32.mrb[0].mxu0
    %v144 = vadd.f32 0.0, %v143
    %v145 = vpop.f32.mrb[0].mxu0
    %146 = vmatprep.mubr.f32.mxu0 0.0
    %147 = vmatmul.mubr.f32.gmra.mrb[0].mxu0 %v71
    %v148 = vpop.f32.mrb[0].mxu0
    %v149 = vadd.f32 0.0, %v148
    %v150 = vpop.f32.mrb[0].mxu0
    %151 = vdwg.mxu0
    %vm152 = vcmask 80896
    %v154 = vsel %vm152, %v59, 0
    %v157 = vsel %vm152, %v60, 0
    %vm159 = vcmask 1041408
    %v161 = vsel %vm159, %v62, 0
    %163 = vmatprep.subr.mxu0 0.0
    %164 = vmatpush1.msra.mxu0 %v61
    %165 = vmatprep.subr.mxu0 0.0
    %166 = vmatpush1.msra.mxu0 %v161
    %167 = vmatprep.subr.mxu0 0.0
    %168 = vmatpush1.msra.mxu0 0.0
    %169 = vmatprep.subr.mxu0 0.0
    %170 = vmatpush1.msra.mxu0 0.0
    %171 = vmatprep.subr.mxu0 0.0
    %172 = vmatpush1.msra.mxu0 0.0
    %173 = vmatprep.subr.mxu0 0.0
    %174 = vmatpush1.msra.mxu0 0.0
    %175 = vmatprep.subr.mxu0 0.0
    %176 = vmatpush1.msra.mxu0 0.0
    %177 = vmatprep.subr.mxu0 0.0
    %178 = vmatpush1.msra.mxu0 0.0
    %179 = vmatprep.subr.mxu0 0.0
    %180 = vmatpush1.msra.mxu0 0.0
    %181 = vmatprep.subr.mxu0 0.0
    %182 = vmatpush1.msra.mxu0 0.0
    %183 = vmatprep.subr.mxu0 0.0
    %184 = vmatpush1.msra.mxu0 0.0
    %185 = vmatprep.subr.mxu0 0.0
    %186 = vmatpush1.msra.mxu0 0.0
    %187 = vmatprep.subr.mxu0 0.0
    %188 = vmatpush1.msra.mxu0 0.0
    %189 = vmatprep.subr.mxu0 0.0
    %190 = vmatpush1.msra.mxu0 0.0
    %191 = vmatprep.subr.mxu0 0.0
    %192 = vmatpush1.msra.mxu0 0.0
    %193 = vmatprep.subr.mxu0 0.0
    %194 = vmatpush1.msra.mxu0 0.0
    %195 = vmatprep.subr.mxu0 0.0
    %196 = vmatpush1.msra.mxu0 0.0
    %197 = vmatprep.subr.mxu0 0.0
    %198 = vmatpush1.msra.mxu0 0.0
    %199 = vmatprep.subr.mxu0 0.0
    %200 = vmatpush1.msra.mxu0 0.0
    %201 = vmatprep.subr.mxu0 0.0
    %202 = vmatpush1.msra.mxu0 0.0
    %203 = vmatprep.subr.mxu0 0.0
    %204 = vmatpush1.msra.mxu0 0.0
    %205 = vmatprep.subr.mxu0 0.0
    %206 = vmatpush1.msra.mxu0 0.0
    %207 = vmatprep.subr.mxu0 0.0
    %208 = vmatpush1.msra.mxu0 0.0
    %209 = vmatprep.subr.mxu0 0.0
    %210 = vmatpush1.msra.mxu0 0.0
    %211 = vmatprep.subr.mxu0 0.0
    %212 = vmatpush1.msra.mxu0 0.0
    %213 = vmatprep.subr.mxu0 0.0
    %214 = vmatpush1.msra.mxu0 0.0
    %215 = vmatprep.subr.mxu0 0.0
    %216 = vmatpush1.msra.mxu0 0.0
    %217 = vmatprep.subr.mxu0 0.0
    %218 = vmatpush1.msra.mxu0 0.0
    %219 = vmatprep.subr.mxu0 0.0
    %220 = vmatpush1.msra.mxu0 0.0
    %221 = vmatprep.subr.mxu0 0.0
    %222 = vmatpush1.msra.mxu0 0.0
    %223 = vmatprep.subr.mxu0 0.0
    %224 = vmatpush1.msra.mxu0 0.0
    %225 = vmatprep.subr.mxu0 0.0
    %226 = vmatpush1.msra.mxu0 0.0
    %227 = vmatprep.mubr.f32.mxu0 0.0
    %228 = vmatmul.mubr.f32.gmra.mrb[0].mxu0 %v154
    %v229 = vpop.f32.mrb[0].mxu0
    %v230 = vadd.f32 %v144, %v229
    %v231 = vpop.f32.mrb[0].mxu0
    %232 = vmatprep.mubr.f32.mxu0 0.0
    %233 = vmatmul.mubr.f32.gmra.mrb[0].mxu0 %v157
    %v234 = vpop.f32.mrb[0].mxu0
    %v235 = vadd.f32 %v149, %v234
    %v236 = vpop.f32.mrb[0].mxu0
    %237 = vdwg.mxu0
    %v238 = vld [vmem:[%s0] sm:$0x1]
    %v239 = vld [vmem:[%s0 + $0x1] sm:$0x1]
    %v242 = vlaneseq
    %v243 = vshrl.u32 %v242, 7
    %v244 = vsub.s32 0, %v243
    %v245 = vrot.slane %v238, %v244
    %v246 = vlaneseq
    %v247 = vshrl.u32 %v246, 7
    %v248 = vsub.s32 0, %v247
    %v249 = vrot.slane %v239, %v248
    %v252 = vadd.f32 %v230, %v245
    %v253 = vadd.f32 %v235, %v249
    %vm254 = vcmask 171008
    %255 = vst.msk [vmem:[#allocation2] sm:$0xff] %vm254, %v252
    %256 = vst.msk [vmem:[#allocation2 + $0x8] sm:$0xff] %vm254, %v253
    // Predicated region
    $region22: #{tpu_custom_call.1} parent=1 // pred_check
      _
    $region23: #{tpu_custom_call.1} parent=1 // pred_check_branch
      %258 = sbr.rel (0) target = $region25
    $region24: #{tpu_custom_call.1} parent=1 // pred_region
      %s260 = ssub.s32 256, 256
      %261 = vsyncadd [#allocation3], %s260
      %s262 = sshll.u32 [#allocation2], 4
      %s263 = int_to_ptr.vmem [resolvable:$true] %s262
      %268 = dma.vmem_to_hbm [thread:$0]  %s263, 256, %s5, [#allocation3], 128, 128, 8
    $region25: #{tpu_custom_call.1} parent=1 // pred_fallthru
      _
    // Predicated region
    $region26: #{tpu_custom_call.1} parent=1 // pred_check
      _
    $region27: #{tpu_custom_call.1} parent=1 // pred_check_branch
      %270 = sbr.rel (0) target = $region29
    $region28: #{tpu_custom_call.1} parent=1 // pred_region
      %271 = dma.done [#allocation3], 256
    $region29: #{tpu_custom_call.1} parent=1 // pred_fallthru
      _
    %272 = vsyncpa [#allocation3], 1

</llo_original>
